<compile_context>
chip_gen: v5e
topology: v5e:2x2
jax: 0.10.0
libtpu: 0.0.40
codegen_flags: <defaults>
</compile_context>

<pallas_src>
import math

import jax
import jax.numpy as jnp
from jax.experimental import pallas as pl
from jax.experimental.pallas import tpu as pltpu


# ------------------------------ small helpers ------------------------------- #

def _round_up(x: int, m: int) -> int:
    return ((x + m - 1) // m) * m


def _pick_divisor(total: int, base: int, quantum: int) -> int:
    """Largest tile <= base that divides `total` (total is a multiple of quantum)."""
    if total <= base:
        return total
    cand = (base // quantum) * quantum
    while cand >= quantum:
        if total % cand == 0:
            return cand
        cand -= quantum
    return quantum


def _tpu_generation() -> str:
    try:
        kind = jax.devices()[0].device_kind.lower()
    except Exception:
        return "unknown"
    if "v7" in kind:
        return "v7x"
    if "v6" in kind:
        return "v6e"
    if "v5" in kind and ("lite" in kind or "v5e" in kind):
        return "v5e"
    if "v5" in kind or "v4" in kind:
        return "big"            # v5p / v4: 128 MiB VMEM
    return "unknown"


def _tiling(m: int, two_n_pad: int, kp: int, gen: str):
    """(tm, tn, tk, vmem_limit_bytes), generation-aware."""
    if gen == "v5e":
        base_tm, base_tn, base_tk = 256, 256, 512
        vmem_limit = 100 * (1 << 20)
    elif gen in ("v6e", "big"):
        base_tm, base_tn, base_tk = 512, 512, 512
        vmem_limit = 100 * (1 << 20)
    elif gen == "v7x":
        base_tm, base_tn, base_tk = 512, 512, 512
        vmem_limit = 48 * (1 << 20)
    else:
        base_tm, base_tn, base_tk = 256, 256, 512
        vmem_limit = 48 * (1 << 20)

    if m > base_tm:
        tm = base_tm
    else:
        tm = _round_up(max(m, 1), 16)     # bf16-friendly sublane packing
    tn = _pick_divisor(two_n_pad, base_tn, 128)
    tk = _pick_divisor(kp, base_tk, 128)
    return tm, tn, tk, vmem_limit


# ------------------------------ Pallas kernel ------------------------------- #

def _make_dft_kernel(compute_dtype):
    def kernel(x_ref, w_ref, b_ref, o_ref, acc_ref):
        k = pl.program_id(2)

        @pl.when(k == 0)
        def _init():
            acc_ref[...] = jnp.zeros_like(acc_ref)

        xv = x_ref[...]
        if xv.dtype != compute_dtype:
            xv = xv.astype(compute_dtype)           # in-kernel cast (VPU), no HBM pass
        acc_ref[...] += jnp.dot(xv, w_ref[...],
                                preferred_element_type=jnp.float32)

        @pl.when(k == pl.num_programs(2) - 1)
        def _finalize():
            o_ref[...] = (acc_ref[...] + b_ref[...]).astype(o_ref.dtype)

    return kernel


# ----------------------------- parameter setup ------------------------------ #

def _dft_weight_halves(in_features: int, out_features: int):
    """f32 twiddle factors matching LinearDFT.dft_kernel.

    Phase index (fc * t) is reduced mod in_features in exact int32 arithmetic
    (fc is reduced first, so the product stays < in_features**2).
    """
    fc = jnp.mod(jnp.arange(out_features, dtype=jnp.int32),
                 in_features).reshape(-1, 1)                     # (N, 1)
    t = jnp.arange(in_features, dtype=jnp.int32).reshape(1, -1)  # (1, K)
    k_mod = jnp.mod(fc * t, in_features).astype(jnp.float32)
    ang = k_mod * jnp.float32(2.0 * math.pi / in_features)
    norm = jnp.float32(1.0 / math.sqrt(in_features))
    w_real = norm * jnp.cos(ang)        # (N, K)  == weights[..., 0]
    w_imag = -norm * jnp.sin(ang)       # (N, K)  == weights[..., 1]
    return w_real, w_imag


def make_linear_dft_params(in_features: int, out_features: int,
                           compute_dtype=jnp.float32):
    """Precompute (and pad) the DFT weight slabs once, hoisted out of forward.

    w_real : (Kp, 2Np)  columns interleaved (re_0, im_0, re_1, im_1, ...)
    w_cplx : (2Kp, 2Np) rows ALSO interleaved so that x reshaped (..., K, 2)->(M, 2K)
             needs a single matmul:  row 2k = [wr_k | wi_k],  row 2k+1 = [-wi_k | wr_k]
    Both are zero-padded to 128 multiples on the contraction and output-column axes
    (lane-dense stores, full MXU passes) at build time -> zero runtime cost.
    """
    wr, wi = _dft_weight_halves(in_features, out_features)
    wr_t, wi_t = wr.T, wi.T                                      # (K, N)
    two_n = 2 * out_features

    a = jnp.stack([wr_t, wi_t], axis=-1).reshape(in_features, two_n)   # even rows
    b = jnp.stack([-wi_t, wr_t], axis=-1).reshape(in_features, two_n)  # odd rows
    w_real = a
    w_cplx = jnp.stack([a, b], axis=1).reshape(2 * in_features, two_n)

    two_n_pad = _round_up(two_n, 128)
    kp_r = _round_up(in_features, 128)
    kp_c = _round_up(2 * in_features, 128)
    w_real = jnp.pad(w_real, ((0, kp_r - in_features), (0, two_n_pad - two_n)))
    w_cplx = jnp.pad(w_cplx, ((0, kp_c - 2 * in_features), (0, two_n_pad - two_n)))

    return {
        "w_real": jnp.asarray(w_real, compute_dtype),
        "w_cplx": jnp.asarray(w_cplx, compute_dtype),
        "in_features": in_features,
        "out_features": out_features,
    }


# ------------------------------ wrapper (glue) ------------------------------ #

def linear_dft_forward(x, bias, params):
    """Pallas-backed forward pass matching LinearDFT.forward.

    x:     (..., in_features) real, or (..., in_features, 2) complex.
    bias:  (out_features, 2) or None.
    params: output of make_linear_dft_params.
    """
    K = params["in_features"]
    N = params["out_features"]
    two_n = 2 * N

    x_is_complex = (x.shape[-1] == 2)          # same rule as the torch module
    if x_is_complex:
        assert x.shape[-2] == K, "params built for a different in_features"
        w = params["w_cplx"]
        k_eff = 2 * K
        lead = x.shape[:-2]
    else:
        assert x.shape[-1] == K, "params built for a different in_features"
        w = params["w_real"]
        k_eff = K
        lead = x.shape[:-1]

    kp, two_n_pad = w.shape
    compute_dtype = w.dtype
    out_dtype = x.dtype

    M = int(math.prod(lead)) if lead else 1
    gen = _tpu_generation()
    tm, tn, tk, vmem_limit = _tiling(M, two_n_pad, kp, gen)
    Mp = _round_up(max(M, 1), tm)

    # Flatten (free reshape; for complex this row-interleaves (re, im) pairs).
    x2d = x.reshape(M, k_eff)
    pad_k = kp - k_eff
    pad_m = Mp - M
    if pad_k or pad_m:
        # Padded K region multiplies zero weight rows; padded M rows are sliced off.
        x2d = jnp.pad(x2d, ((0, pad_m), (0, pad_k)))

    if bias is not None:
        b_row = bias.astype(jnp.float32).reshape(1, two_n)   # interleaved (re, im)
    else:
        b_row = jnp.zeros((1, two_n), jnp.float32)
    if two_n_pad != two_n:
        b_row = jnp.pad(b_row, ((0, 0), (0, two_n_pad - two_n)))

    # Grid: (out-column tiles, row tiles, K tiles).  j first so the v7x 2-TC split
    # shards the weight stream; k innermost feeds the f32 accumulator.
    grid = (two_n_pad // tn, Mp // tm, kp // tk)

    y = pl.pallas_call(
        _make_dft_kernel(compute_dtype),
        out_shape=jax.ShapeDtypeStruct((Mp, two_n_pad), out_dtype),
        grid_spec=pltpu.PrefetchScalarGridSpec(
            num_scalar_prefetch=0,
            grid=grid,
            in_specs=[
                pl.BlockSpec((tm, tk), lambda j, i, k: (i, k)),   # x
                pl.BlockSpec((tk, tn), lambda j, i, k: (k, j)),   # W
                pl.BlockSpec((1, tn), lambda j, i, k: (0, j)),    # bias row
            ],
            out_specs=pl.BlockSpec((tm, tn), lambda j, i, k: (i, j)),
            scratch_shapes=[pltpu.VMEM((tm, tn), jnp.float32)],
        ),
        compiler_params=pltpu.CompilerParams(
            dimension_semantics=("parallel", "parallel", "arbitrary"),
            vmem_limit_bytes=int(vmem_limit),
        ),
    )(x2d, w, b_row)

    y = y[:M, :two_n]
    # Free reshape: interleaved columns -> (..., out_features, 2)
    return y.reshape(lead + (N, 2))


# --------------------------- pure-JAX reference ----------------------------- #

def linear_dft_reference(x, bias, out_features):
    x_is_complex = x.shape[-1] == 2
    in_features = x.shape[-1 - int(x_is_complex)]
    wr, wi = _dft_weight_halves(in_features, out_features)
    xf = x.astype(jnp.float32)
    if x_is_complex:
        yr = xf[..., 0] @ wr.T - xf[..., 1] @ wi.T
        yi = xf[..., 0] @ wi.T + xf[..., 1] @ wr.T
    else:
        yr = xf @ wr.T
        yi = xf @ wi.T
    y = jnp.stack([yr, yi], axis=-1)
    if bias is not None:
        y = y + bias
    return y


# ---------------------------------- main ------------------------------------ #

if __name__ == "__main__":
    in_features = 32
    out_features = 16
    batch, seq = 2, 8

    key = jax.random.PRNGKey(0)
    k_x, k_xc, k_b = jax.random.split(key, 3)

    # Bias ~ Normal(0, 0.5), shape (out_features, 2), as in the module __init__.
    bias = 0.5 * jax.random.normal(k_b, (out_features, 2), dtype=jnp.float32)

    # Precomputed (hoisted, padded) DFT weight slabs, f32 compute path.
    params_f32 = make_linear_dft_params(in_features, out_features,
                                        compute_dtype=jnp.float32)

    # Real-input path: x of shape (batch, seq, in_features)
    x = jax.random.normal(k_x, (batch, seq, in_features), dtype=jnp.float32)
    y = jax.block_until_ready(linear_dft_forward(x, bias, params_f32))
    y_ref = linear_dft_reference(x, bias, out_features)
    assert y.shape == (batch, seq, out_features, 2)
    assert jnp.allclose(y, y_ref, atol=1e-4, rtol=1e-4)

    # Complex-input path: x of shape (batch, seq, in_features, 2)
    xc = jax.random.normal(k_xc, (batch, seq, in_features, 2), dtype=jnp.float32)
    yc = jax.block_until_ready(linear_dft_forward(xc, bias, params_f32))
    yc_ref = linear_dft_reference(xc, bias, out_features)
    assert yc.shape == (batch, seq, out_features, 2)
    assert jnp.allclose(yc, yc_ref, atol=1e-4, rtol=1e-4)

    # No-bias path (module supports bias=False)
    y_nb = jax.block_until_ready(linear_dft_forward(x, None, params_f32))
    y_nb_ref = linear_dft_reference(x, None, out_features)
    assert jnp.allclose(y_nb, y_nb_ref, atol=1e-4, rtol=1e-4)

    # bf16 fast path (native MXU dtype, f32 accumulation, in-kernel cast of x).
    params_bf16 = make_linear_dft_params(in_features, out_features,
                                         compute_dtype=jnp.bfloat16)
    yb = jax.block_until_ready(linear_dft_forward(x, bias, params_bf16))
    assert yb.shape == (batch, seq, out_features, 2)
    assert jnp.allclose(yb.astype(jnp.float32), y_ref, atol=1e-1, rtol=1e-1)
    ycb = jax.block_until_ready(linear_dft_forward(xc, bias, params_bf16))
    assert jnp.allclose(ycb.astype(jnp.float32), yc_ref, atol=1e-1, rtol=1e-1)

    print("KERNEL_OK")
</pallas_src>

<mosaic_0001>
module attributes {stable_mosaic.version = 11 : i64} {
  func.func @kernel(%arg0: i32, %arg1: i32, %arg2: i32, %arg3: memref<16x128xf32, #tpu.memory_space<vmem>>, %arg4: memref<128x128xf32, #tpu.memory_space<vmem>>, %arg5: memref<1x128xf32, #tpu.memory_space<vmem>>, %arg6: memref<16x128xf32, #tpu.memory_space<vmem>>, %arg7: memref<16x128xf32, #tpu.memory_space<vmem>>) attributes {dimension_semantics = [#tpu.dimension_semantics<parallel>, #tpu.dimension_semantics<parallel>, #tpu.dimension_semantics<arbitrary>], iteration_bounds = array<i64: 1, 1, 1>, scalar_prefetch = 0 : i64, scratch_operands = 1 : i64, tpu.core_type = #tpu.core_type<tc>, window_params = [{transform_indices = @transform_0, window_bounds = array<i64: 16, 128>}, {transform_indices = @transform_1, window_bounds = array<i64: 128, 128>}, {transform_indices = @transform_2, window_bounds = array<i64: 1, 128>}, {transform_indices = @transform_3, window_bounds = array<i64: 16, 128>}]} {
    %c0_i32 = arith.constant 0 : i32
    %0 = arith.cmpi eq, %arg2, %c0_i32 : i32
    %1 = arith.extui %0 : i1 to i32
    %c0_i32_0 = arith.constant 0 : i32
    %2 = arith.cmpi ne, %1, %c0_i32_0 : i32
    scf.if %2 {
      %cst_10 = arith.constant 0.000000e+00 : f32
      %12 = vector.broadcast %cst_10 : f32 to vector<16x128xf32>
      %c0_11 = arith.constant 0 : index
      %c0_12 = arith.constant 0 : index
      %13 = vector.load %arg7[%c0_11, %c0_12] : memref<16x128xf32, #tpu.memory_space<vmem>>, vector<16x128xf32>
      tpu.vector_store %arg7[%c0_11, %c0_12], %12 {strides = array<i32>} : memref<16x128xf32, #tpu.memory_space<vmem>>, vector<16x128xf32>,
    } else {
    }
    %c0 = arith.constant 0 : index
    %c0_1 = arith.constant 0 : index
    %3 = vector.load %arg3[%c0, %c0_1] : memref<16x128xf32, #tpu.memory_space<vmem>>, vector<16x128xf32>
    %c0_2 = arith.constant 0 : index
    %c0_3 = arith.constant 0 : index
    %4 = vector.load %arg7[%c0_2, %c0_3] : memref<16x128xf32, #tpu.memory_space<vmem>>, vector<16x128xf32>
    %c0_4 = arith.constant 0 : index
    %c0_5 = arith.constant 0 : index
    %5 = vector.load %arg4[%c0_4, %c0_5] : memref<128x128xf32, #tpu.memory_space<vmem>>, vector<128x128xf32>
    %cst = arith.constant dense<0.000000e+00> : vector<16x128xf32>
    %6 = tpu.matmul %3, %5, %cst {dimension_numbers = #tpu.dot_dimension_numbers<[1], [0], [0], [1], [0, 0, 1, 1], [], []>} : vector<16x128xf32>, vector<128x128xf32>, vector<16x128xf32> -> vector<16x128xf32>
    %7 = arith.addf %4, %6 : vector<16x128xf32>
    %c0_6 = arith.constant 0 : index
    %c0_7 = arith.constant 0 : index
    %8 = vector.load %arg7[%c0_6, %c0_7] : memref<16x128xf32, #tpu.memory_space<vmem>>, vector<16x128xf32>
    tpu.vector_store %arg7[%c0_6, %c0_7], %7 {strides = array<i32>} : memref<16x128xf32, #tpu.memory_space<vmem>>, vector<16x128xf32>,
    %c0_i32_8 = arith.constant 0 : i32
    %9 = arith.cmpi eq, %arg2, %c0_i32_8 : i32
    %10 = arith.extui %9 : i1 to i32
    %c0_i32_9 = arith.constant 0 : i32
    %11 = arith.cmpi ne, %10, %c0_i32_9 : i32
    scf.if %11 {
      %c0_10 = arith.constant 0 : index
      %c0_11 = arith.constant 0 : index
      %12 = vector.load %arg7[%c0_10, %c0_11] : memref<16x128xf32, #tpu.memory_space<vmem>>, vector<16x128xf32>
      %c0_12 = arith.constant 0 : index
      %c0_13 = arith.constant 0 : index
      %13 = vector.load %arg5[%c0_12, %c0_13] : memref<1x128xf32, #tpu.memory_space<vmem>>, vector<1x128xf32>
      %14 = vector.broadcast %13 : vector<1x128xf32> to vector<16x128xf32>
      %15 = arith.addf %12, %14 : vector<16x128xf32>
      %c0_14 = arith.constant 0 : index
      %c0_15 = arith.constant 0 : index
      %16 = vector.load %arg6[%c0_14, %c0_15] : memref<16x128xf32, #tpu.memory_space<vmem>>, vector<16x128xf32>
      tpu.vector_store %arg6[%c0_14, %c0_15], %15 {strides = array<i32>} : memref<16x128xf32, #tpu.memory_space<vmem>>, vector<16x128xf32>,
    } else {
    }
    return
  }
  func.func @transform_0(%arg0: i32, %arg1: i32, %arg2: i32) -> (i32, i32) {
    %c0_i32 = arith.constant 0 : i32
    return %arg1, %arg2 : i32, i32
  }
  func.func @transform_1(%arg0: i32, %arg1: i32, %arg2: i32) -> (i32, i32) {
    %c0_i32 = arith.constant 0 : i32
    return %arg2, %arg0 : i32, i32
  }
  func.func @transform_2(%arg0: i32, %arg1: i32, %arg2: i32) -> (i32, i32) {
    %c0_i32 = arith.constant 0 : i32
    %c0_i32_0 = arith.constant 0 : i32
    return %c0_i32, %arg0 : i32, i32
  }
  func.func @transform_3(%arg0: i32, %arg1: i32, %arg2: i32) -> (i32, i32) {
    %c0_i32 = arith.constant 0 : i32
    return %arg1, %arg0 : i32, i32
  }
}

</mosaic_0001>

<llo_original>
// kernel: tpu_custom_call.1
$region0: #{tpu_custom_call.1}
  #allocation0 [shape = 'u32[]', space=smem, size = 0x4, offset = 0x4, fixed_abs, tag = 'smem constant byte address 0x4 - core index']
  #allocation1 [shape = 'u32[72,128]{1,0:T(1,128)}', space=vmem, size = 0x9000, scoped, tag = 'internal scratch']
  #allocation2 [shape = 'f32[16,128]{1,0:T(8,128)}', space=vmem, size = 0x2000, scoped, tag = 'scratch operand']
  %s0 = inlined_call_operand.hbm [shape: f32[16,128], index: 0, kind: input, shape index: {}]
  %s1 = inlined_call_operand.hbm [shape: f32[128,128], index: 1, kind: input, shape index: {}]
  %s2 = inlined_call_operand.vmem [shape: f32[1,128], index: 2, kind: input, shape index: {}]
  %s3 = inlined_call_operand.hbm [shape: f32[16,128], index: 3, kind: output, shape index: {}]
  %s4 = sld [smem:[#allocation0]]
  $region38: #{tpu_custom_call.1} parent=0
    _
  %s6 = ssub.s32 1, %s4
  %s7 = scalar_select 0, %s6, %s4
  $region1: #{tpu_custom_call.1} parent=0
    #allocation3 [shape = 'u8[8192]{0}', space=vmem, size = 0x2000, scoped, tag = 'input window, operand 0, single buffered']
    #allocation4 [shape = 's32[1]{0}', space=sflag, size = 0x4, scoped, tag = 'scoped memory for tpu_custom_call.1']
    #allocation5 [shape = 's32[1]{0}', space=sflag, size = 0x4, scoped, tag = 'scoped memory for tpu_custom_call.1']
    #allocation6 [shape = 'u8[65536]{0}', space=vmem, size = 0x10000, scoped, tag = 'input window, operand 1, single buffered']
    #allocation7 [shape = 's32[1]{0}', space=sflag, size = 0x4, scoped, tag = 'scoped memory for tpu_custom_call.1']
    #allocation8 [shape = 'u8[8192]{0}', space=vmem, size = 0x2000, scoped, tag = 'output window, operand 0, single buffered']
    %8 = vsyncpa [#allocation4], 0
    %9 = vsyncpa [#allocation7], 0
    %10 = vsyncpa [#allocation5], 0
    // Predicated region
    $region2: #{tpu_custom_call.1} parent=1 // pred_check
      _
    $region3: #{tpu_custom_call.1} parent=1 // pred_check_branch
      %12 = sbr.rel (0) target = $region5
    $region4: #{tpu_custom_call.1} parent=1 // pred_region
      %14 = vsyncadd [#allocation4], 0
      %s15 = sshll.u32 %s0, 4
      %s16 = int_to_ptr.hbm [resolvable:$true] %s15
      %s17 = sshll.u32 [#allocation3], 4
      %s18 = int_to_ptr.vmem [resolvable:$true] %s17
      %23 = dma.hbm_to_vmem [thread:$0]  %s16, 256, %s18, [#allocation4], 128, 128, 8
    $region5: #{tpu_custom_call.1} parent=1 // pred_fallthru
      _
    // Predicated region
    $region6: #{tpu_custom_call.1} parent=1 // pred_check
      _
    $region7: #{tpu_custom_call.1} parent=1 // pred_check_branch
      %25 = sbr.rel (0) target = $region9
    $region8: #{tpu_custom_call.1} parent=1 // pred_region
      %27 = vsyncadd [#allocation7], 0
      %s28 = sshll.u32 %s1, 4
      %s29 = int_to_ptr.hbm [resolvable:$true] %s28
      %s30 = sshll.u32 [#allocation6], 4
      %s31 = int_to_ptr.vmem [resolvable:$true] %s30
      %36 = dma.hbm_to_vmem [thread:$0]  %s29, 2048, %s31, [#allocation7], 128, 128, 8
    $region9: #{tpu_custom_call.1} parent=1 // pred_fallthru
      _
    // Predicated region
    $region10: #{tpu_custom_call.1} parent=1 // pred_check
      _
    $region11: #{tpu_custom_call.1} parent=1 // pred_check_branch
      %38 = sbr.rel (0) target = $region13
    $region12: #{tpu_custom_call.1} parent=1 // pred_region
      _
    $region13: #{tpu_custom_call.1} parent=1 // pred_fallthru
      _
    // Predicated region
    $region14: #{tpu_custom_call.1} parent=1 // pred_check
      _
    $region15: #{tpu_custom_call.1} parent=1 // pred_check_branch
      %40 = sbr.rel (0) target = $region17
    $region16: #{tpu_custom_call.1} parent=1 // pred_region
      %42 = dma.done [#allocation4], 256
    $region17: #{tpu_custom_call.1} parent=1 // pred_fallthru
      _
    // Predicated region
    $region18: #{tpu_custom_call.1} parent=1 // pred_check
      _
    $region19: #{tpu_custom_call.1} parent=1 // pred_check_branch
      %44 = sbr.rel (0) target = $region21
    $region20: #{tpu_custom_call.1} parent=1 // pred_region
      %46 = dma.done [#allocation7], 2048
    $region21: #{tpu_custom_call.1} parent=1 // pred_fallthru
      _
    %p47 = scmp.eq.s32.totalorder 0, 0
    // Predicated region
    $region22: #{tpu_custom_call.1} parent=1 // pred_check
      %p48 = pneg %p47
    $region23: #{tpu_custom_call.1} parent=1 // pred_check_branch
      %50 = sbr.rel (%p48) target = $region25
    $region24: #{tpu_custom_call.1} parent=1 // pred_region
      %51 = vst [vmem:[#allocation2] sm:$0xff] 0.0
      %52 = vst [vmem:[#allocation2 + $0x8] sm:$0xff] 0.0
    $region25: #{tpu_custom_call.1} parent=1 // pred_fallthru
      _
    %v53 = vld [vmem:[#allocation3] sm:$0xff]
    %v54 = vld [vmem:[#allocation3 + $0x8] sm:$0xff]
    %v55 = vld [vmem:[#allocation2] sm:$0xff]
    %v56 = vld [vmem:[#allocation2 + $0x8] sm:$0xff]
    %v57 = vld [vmem:[#allocation6] sm:$0xff]
    %v58 = vld [vmem:[#allocation6 + $0x8] sm:$0xff]
    %v59 = vld [vmem:[#allocation6 + $0x10] sm:$0xff]
    %v60 = vld [vmem:[#allocation6 + $0x18] sm:$0xff]
    %v61 = vld [vmem:[#allocation6 + $0x20] sm:$0xff]
    %v62 = vld [vmem:[#allocation6 + $0x28] sm:$0xff]
    %v63 = vld [vmem:[#allocation6 + $0x30] sm:$0xff]
    %v64 = vld [vmem:[#allocation6 + $0x38] sm:$0xff]
    %v65 = vld [vmem:[#allocation6 + $0x40] sm:$0xff]
    %v66 = vld [vmem:[#allocation6 + $0x48] sm:$0xff]
    %v67 = vld [vmem:[#allocation6 + $0x50] sm:$0xff]
    %v68 = vld [vmem:[#allocation6 + $0x58] sm:$0xff]
    %v69 = vld [vmem:[#allocation6 + $0x60] sm:$0xff]
    %v70 = vld [vmem:[#allocation6 + $0x68] sm:$0xff]
    %v71 = vld [vmem:[#allocation6 + $0x70] sm:$0xff]
    %v72 = vld [vmem:[#allocation6 + $0x78] sm:$0xff]
    %73 = vmatpush.msra.mxu0 %v72
    %74 = vmatpush.msra.mxu0 %v71
    %75 = vmatpush.msra.mxu0 %v70
    %76 = vmatpush.msra.mxu0 %v69
    %77 = vmatpush.msra.mxu0 %v68
    %78 = vmatpush.msra.mxu0 %v67
    %79 = vmatpush.msra.mxu0 %v66
    %80 = vmatpush.msra.mxu0 %v65
    %81 = vmatpush.msra.mxu0 %v64
    %82 = vmatpush.msra.mxu0 %v63
    %83 = vmatpush.msra.mxu0 %v62
    %84 = vmatpush.msra.mxu0 %v61
    %85 = vmatpush.msra.mxu0 %v60
    %86 = vmatpush.msra.mxu0 %v59
    %87 = vmatpush.msra.mxu0 %v58
    %88 = vmatpush.msra.mxu0 %v57
    %89 = vmatmul.f32.gmra.mxu0 %v53
    %v90 = vpop.f32.mrf.mxu0
    %v91 = vadd.f32 0.0, %v90
    %92 = vmatmul.f32.gmra.mxu0 %v54
    %v93 = vpop.f32.mrf.mxu0
    %v94 = vadd.f32 0.0, %v93
    %95 = vdwg.mxu0
    %v96 = vadd.f32 %v55, %v91
    %v97 = vadd.f32 %v56, %v94
    %98 = vst [vmem:[#allocation2] sm:$0xff] %v96
    %99 = vst [vmem:[#allocation2 + $0x8] sm:$0xff] %v97
    // Predicated region
    $region26: #{tpu_custom_call.1} parent=1 // pred_check
      %p100 = pneg %p47
    $region27: #{tpu_custom_call.1} parent=1 // pred_check_branch
      %102 = sbr.rel (%p100) target = $region29
    $region28: #{tpu_custom_call.1} parent=1 // pred_region
      %v103 = vld [vmem:[#allocation2] sm:$0xff]
      %v104 = vld [vmem:[#allocation2 + $0x8] sm:$0xff]
      %v105 = vld [vmem:[%s2] sm:$0x1]
      %v107 = vperm.slane %v105, 0
      %v109 = vadd.f32 %v103, %v107
      %v110 = vadd.f32 %v104, %v107
      %111 = vst [vmem:[#allocation8] sm:$0xff] %v109
      %112 = vst [vmem:[#allocation8 + $0x8] sm:$0xff] %v110
    $region29: #{tpu_custom_call.1} parent=1 // pred_fallthru
      _
    // Predicated region
    $region30: #{tpu_custom_call.1} parent=1 // pred_check
      _
    $region31: #{tpu_custom_call.1} parent=1 // pred_check_branch
      %114 = sbr.rel (0) target = $region33
    $region32: #{tpu_custom_call.1} parent=1 // pred_region
      %116 = vsyncadd [#allocation5], 0
      %s117 = sshll.u32 [#allocation8], 4
      %s118 = int_to_ptr.vmem [resolvable:$true] %s117
      %s119 = sshll.u32 %s3, 4
      %s120 = int_to_ptr.hbm [resolvable:$true] %s119
      %125 = dma.vmem_to_hbm [thread:$0]  %s118, 256, %s120, [#allocation5], 128, 128, 8
    $region33: #{tpu_custom_call.1} parent=1 // pred_fallthru
      _
    // Predicated region
    $region34: #{tpu_custom_call.1} parent=1 // pred_check
      _
    $region35: #{tpu_custom_call.1} parent=1 // pred_check_branch
      %127 = sbr.rel (0) target = $region37
    $region36: #{tpu_custom_call.1} parent=1 // pred_region
      %129 = dma.done [#allocation5], 256
    $region37: #{tpu_custom_call.1} parent=1 // pred_fallthru
      _
    %130 = vsyncpa [#allocation4], 1
    %131 = vsyncpa [#allocation7], 1
    %132 = vsyncpa [#allocation5], 1

</llo_original>
